<compile_context>
chip_gen: v7x
topology: tpu7x:2x2x1
jax: 0.10.0
libtpu: 0.0.40
codegen_flags: <defaults>
</compile_context>

<pallas_src>
import functools
import math

import jax
import jax.numpy as jnp
from jax.experimental import pallas as pl
from jax.experimental.pallas import tpu as pltpu

# Model hyper-parameters (small, consistent with the module's __init__ signature).
D_MODEL = 32
D_INNER = 64
N_HEAD = 2
D_K = 8
D_V = 8
LN_EPS = 1e-5
NEG_BIG = -1e30  # finite "minus infinity": fully-masked rows stay NaN-free


# ----------------------------- shared helpers -----------------------------
def _layer_norm(x, gamma, beta):
    # mean/var written with explicit * (1/D) so no divides are emitted; rsqrt -> EUP.
    inv_d = 1.0 / x.shape[-1]
    mu = jnp.sum(x, axis=-1, keepdims=True) * inv_d
    xc = x - mu
    var = jnp.sum(xc * xc, axis=-1, keepdims=True) * inv_d
    return xc * jax.lax.rsqrt(var + LN_EPS) * gamma + beta


# ------------------------------- Pallas kernel -------------------------------
def encoder_layer_kernel(x_ref, bias_ref, nonpad_ref,
                         wqkv_ref, bqkv_ref, wo_ref, bo_ref, ln1_g_ref, ln1_b_ref,
                         w1_ref, b1_ref, w2_ref, b2_ref, ln2_g_ref, ln2_b_ref,
                         out_ref, attn_ref, *, n_head, d_k, d_v, batch, seq):
    """Whole encoder layer for the whole batch in one grid-less invocation.

    x_ref      : (B*L, D)  f32   flattened activations
    bias_ref   : (B, L, L) f32   additive attention-mask bias (mask * NEG_BIG)
    nonpad_ref : (B*L, 1)  f32   non_pad_mask
    wqkv_ref   : (D, H*(dk+dk+dv)) bf16  column-concat of Wq|Wk|Wv (head-major inside)
    bqkv_ref   : (1, H*(dk+dk+dv)) f32   fused Q/K/V bias row
    wo_ref     : (H*dv, D) bf16          output projection
    w1/w2      : bf16 FFN weights; b*, ln* : f32
    out_ref    : (B*L, D)  f32
    attn_ref   : (H*B, L, L) bf16  softmax attention weights (head-major, as PyTorch)
    """
    m = batch * seq
    x = x_ref[...]                                   # (M, D) f32
    nonpad = nonpad_ref[...]                         # (M, 1) f32

    # ---- fused QKV projection: ONE MXU matmul + one fused bias row ----
    qkv = jnp.dot(x.astype(jnp.bfloat16), wqkv_ref[...],
                  preferred_element_type=jnp.float32) + bqkv_ref[...]   # (M, 48) f32
    qkv_bf = qkv.astype(jnp.bfloat16)                # single cast, reused for q/k/v

    # Split columns and regroup to head-major (H*B, L, d) batches.
    # Static lane slices + leading-axis concatenation only (no transposes).
    def heads(col0, d):
        return jnp.concatenate(
            [qkv_bf[:, col0 + h * d: col0 + (h + 1) * d].reshape(batch, seq, d)
             for h in range(n_head)], axis=0)        # (H*B, L, d), head-major

    q = heads(0, d_k)
    k = heads(n_head * d_k, d_k)
    v = heads(2 * n_head * d_k, d_v)

    # ---- scaled dot-product attention, all (head, batch) pairs at once ----
    s = jnp.einsum("bqd,bkd->bqk", q, k,
                   preferred_element_type=jnp.float32) * (1.0 / math.sqrt(d_k))
    # additive mask bias, broadcast over heads in-kernel (mask DMA'd once, not H times)
    s = s + jnp.concatenate([bias_ref[...]] * n_head, axis=0)           # (H*B, L, L)

    # explicit softmax; the divide goes to the EUP approx-reciprocal slot
    s_max = jnp.max(s, axis=-1, keepdims=True)
    e = jnp.exp(s - s_max)
    denom = jnp.sum(e, axis=-1, keepdims=True)
    attn = e * pl.reciprocal(denom, approx=True)                        # (H*B, L, L) f32
    attn_bf = attn.astype(jnp.bfloat16)
    attn_ref[...] = attn_bf                                             # bf16 writeback

    o = jnp.einsum("bqk,bkd->bqd", attn_bf, v,
                   preferred_element_type=jnp.float32)                  # (H*B, L, dv) f32

    # ---- output projection: sum_h o_h @ W_o[h]  (== concat(heads) @ W_o) ----
    # TODO(synk): a literal single (M, H*dv) @ (H*dv, D) matmul needs an unaligned 8-lane
    # concat of the head slices; kept as per-head static weight slices for robustness.
    proj = bo_ref[...]                                                  # (1, D) f32
    for h in range(n_head):
        o_h = o[h * batch:(h + 1) * batch].reshape(m, d_v).astype(jnp.bfloat16)
        proj = proj + jnp.dot(o_h, wo_ref[h * d_v:(h + 1) * d_v, :],
                              preferred_element_type=jnp.float32)       # (M, D)

    # residual + LayerNorm, then `enc_output *= non_pad_mask`
    y1 = _layer_norm(proj + x, ln1_g_ref[...], ln1_b_ref[...]) * nonpad  # (M, D)

    # ---- position-wise FFN (1x1 conv == per-position linear) ----
    h1 = jnp.dot(y1.astype(jnp.bfloat16), w1_ref[...],
                 preferred_element_type=jnp.float32) + b1_ref[...]
    h1 = jnp.maximum(h1, 0.0)
    y2 = jnp.dot(h1.astype(jnp.bfloat16), w2_ref[...],
                 preferred_element_type=jnp.float32) + b2_ref[...]
    out = _layer_norm(y2 + y1, ln2_g_ref[...], ln2_b_ref[...]) * nonpad
    # TODO(synk): lane-dense (>=128-wide) restaging of out/attn ((16,32)->(2,256) etc.)
    # deferred: it needs lane-merging value reshapes; at ~3 KB of output the masked
    # stores are negligible, and natural-shape stores are kept for lowering robustness.
    out_ref[...] = out


# ------------------------------- Python wrapper -------------------------------
def encoder_layer(enc_input, non_pad_mask, slf_attn_mask, params):
    B, L, D = enc_input.shape
    H, dk, dv = N_HEAD, D_K, D_V
    sa, ff = params["slf_attn"], params["pos_ffn"]

    # Layout / dtype plumbing (cheap wrapper-side XLA ops; in a real model the weight
    # concat + bf16 cast would be done once at parameter-load time, not per call).
    x2 = enc_input.reshape(B * L, D)
    nonpad2 = non_pad_mask.reshape(B * L, 1)
    bias = slf_attn_mask.astype(jnp.float32) * NEG_BIG              # (B, L, L), passed once

    wqkv = jnp.concatenate([sa["wq"], sa["wk"], sa["wv"]], axis=1).astype(jnp.bfloat16)
    bqkv = jnp.concatenate([sa["bq"], sa["bk"], sa["bv"]], axis=1)  # (1, H*(2dk+dv)) f32
    wo = sa["wo"].astype(jnp.bfloat16)                              # (H*dv, D)
    w1 = ff["w1"].astype(jnp.bfloat16)
    w2 = ff["w2"].astype(jnp.bfloat16)

    kern = functools.partial(encoder_layer_kernel,
                             n_head=H, d_k=dk, d_v=dv, batch=B, seq=L)
    vmem = pl.BlockSpec(memory_space=pltpu.MemorySpace.VMEM)
    # TODO(synk): at production B/L, replace the grid-less slab with a BlockSpec grid over
    # (head*batch, q-block) [kv axis last, "arbitrary"], dimension_semantics=("parallel",...)
    # so v7x's two TensorCores are used and the attention slab stays under the scoped VMEM
    # limit; at B*L=16 a grid only adds ~0.35us/step overhead.
    out2, attn = pl.pallas_call(
        kern,
        in_specs=[vmem] * 15,
        out_specs=(vmem, vmem),
        out_shape=(jax.ShapeDtypeStruct((B * L, D), jnp.float32),
                   jax.ShapeDtypeStruct((H * B, L, L), jnp.bfloat16)),
    )(x2, bias, nonpad2,
      wqkv, bqkv, wo, sa["bo"], sa["ln_g"], sa["ln_b"],
      w1, ff["b1"], w2, ff["b2"], ff["ln_g"], ff["ln_b"])

    # PyTorch ScaledDotProductAttention returns attn of shape (n_head*B, Lq, Lk), head-major.
    return out2.reshape(B, L, D), attn.astype(jnp.float32)


# ------------------------------- pure-JAX reference -------------------------------
def ref_mha(x, mask, p):
    B, L, D = x.shape
    Q = (x @ p["wq"] + p["bq"]).reshape(B, L, N_HEAD, D_K)
    K = (x @ p["wk"] + p["bk"]).reshape(B, L, N_HEAD, D_K)
    V = (x @ p["wv"] + p["bv"]).reshape(B, L, N_HEAD, D_V)
    s = jnp.einsum("bqhd,bkhd->bhqk", Q, K) / math.sqrt(D_K)
    s = jnp.where(mask[:, None] > 0, NEG_BIG, s)
    a = jax.nn.softmax(s, axis=-1)
    o = jnp.einsum("bhqk,bkhd->bqhd", a, V).reshape(B, L, N_HEAD * D_V)
    o = o @ p["wo"] + p["bo"]
    y = _layer_norm(o + x, p["ln_g"], p["ln_b"])
    return y, jnp.transpose(a, (1, 0, 2, 3)).reshape(N_HEAD * B, L, L)


def ref_ffn(x, p):
    h = jnp.maximum(x @ p["w1"] + p["b1"], 0.0)
    y = h @ p["w2"] + p["b2"]
    return _layer_norm(y + x, p["ln_g"], p["ln_b"])


def ref_encoder_layer(enc_input, non_pad_mask, slf_attn_mask, params):
    y, attn = ref_mha(enc_input, slf_attn_mask, params["slf_attn"])
    y = y * non_pad_mask
    y = ref_ffn(y, params["pos_ffn"]) * non_pad_mask
    return y, attn


# ------------------------------------ params ------------------------------------
def init_mha_params(key):
    ks = jax.random.split(key, 4)
    return dict(
        wq=0.1 * jax.random.normal(ks[0], (D_MODEL, N_HEAD * D_K), jnp.float32),
        bq=jnp.zeros((1, N_HEAD * D_K), jnp.float32),
        wk=0.1 * jax.random.normal(ks[1], (D_MODEL, N_HEAD * D_K), jnp.float32),
        bk=jnp.zeros((1, N_HEAD * D_K), jnp.float32),
        wv=0.1 * jax.random.normal(ks[2], (D_MODEL, N_HEAD * D_V), jnp.float32),
        bv=jnp.zeros((1, N_HEAD * D_V), jnp.float32),
        wo=0.1 * jax.random.normal(ks[3], (N_HEAD * D_V, D_MODEL), jnp.float32),
        bo=jnp.zeros((1, D_MODEL), jnp.float32),
        ln_g=jnp.ones((1, D_MODEL), jnp.float32),
        ln_b=jnp.zeros((1, D_MODEL), jnp.float32),
    )


def init_ffn_params(key):
    k1, k2 = jax.random.split(key)
    return dict(
        w1=0.1 * jax.random.normal(k1, (D_MODEL, D_INNER), jnp.float32),
        b1=jnp.zeros((1, D_INNER), jnp.float32),
        w2=0.1 * jax.random.normal(k2, (D_INNER, D_MODEL), jnp.float32),
        b2=jnp.zeros((1, D_MODEL), jnp.float32),
        ln_g=jnp.ones((1, D_MODEL), jnp.float32),
        ln_b=jnp.zeros((1, D_MODEL), jnp.float32),
    )


# ------------------------------------ main ------------------------------------
if __name__ == "__main__":
    B, L = 2, 8
    root = jax.random.PRNGKey(0)
    k_in, k_p1, k_p2 = jax.random.split(root, 3)

    enc_input = jax.random.normal(k_in, (B, L, D_MODEL), jnp.float32)

    # non_pad_mask: (B, L, 1); last position of batch 1 is padding.
    non_pad_mask = jnp.ones((B, L, 1), jnp.float32).at[1, -1, 0].set(0.0)
    # slf_attn_mask: (B, L, L); 1.0 => masked.  Mask attention TO the padded key.
    slf_attn_mask = jnp.zeros((B, L, L), jnp.float32).at[1, :, -1].set(1.0)

    # TODO(synk): nn.Dropout layers are identity here (inference mode); no RNG applied.
    params = dict(slf_attn=init_mha_params(k_p1), pos_ffn=init_ffn_params(k_p2))

    enc_out, enc_slf_attn = jax.jit(encoder_layer)(
        enc_input, non_pad_mask, slf_attn_mask, params)
    jax.block_until_ready((enc_out, enc_slf_attn))

    ref_out, ref_attn = ref_encoder_layer(
        enc_input, non_pad_mask, slf_attn_mask, params)

    assert enc_out.shape == (B, L, D_MODEL)
    assert enc_slf_attn.shape == (N_HEAD * B, L, L)
    assert jnp.allclose(enc_out, ref_out, atol=2e-2, rtol=2e-2)
    assert jnp.allclose(enc_slf_attn, ref_attn, atol=2e-2, rtol=2e-2)

    print("KERNEL_OK")
</pallas_src>

<mosaic_0001>
module attributes {stable_mosaic.version = 11 : i64} {
  func.func @encoder_layer_kernel(%arg0: memref<16x32xf32, #tpu.memory_space<vmem>>, %arg1: memref<2x8x8xf32, #tpu.memory_space<vmem>>, %arg2: memref<16x1xf32, #tpu.memory_space<vmem>>, %arg3: memref<32x48xbf16, #tpu.memory_space<vmem>>, %arg4: memref<1x48xf32, #tpu.memory_space<vmem>>, %arg5: memref<16x32xbf16, #tpu.memory_space<vmem>>, %arg6: memref<1x32xf32, #tpu.memory_space<vmem>>, %arg7: memref<1x32xf32, #tpu.memory_space<vmem>>, %arg8: memref<1x32xf32, #tpu.memory_space<vmem>>, %arg9: memref<32x64xbf16, #tpu.memory_space<vmem>>, %arg10: memref<1x64xf32, #tpu.memory_space<vmem>>, %arg11: memref<64x32xbf16, #tpu.memory_space<vmem>>, %arg12: memref<1x32xf32, #tpu.memory_space<vmem>>, %arg13: memref<1x32xf32, #tpu.memory_space<vmem>>, %arg14: memref<1x32xf32, #tpu.memory_space<vmem>>, %arg15: memref<16x32xf32, #tpu.memory_space<vmem>>, %arg16: memref<4x8x8xbf16, #tpu.memory_space<vmem>>) attributes {dimension_semantics = [], scalar_prefetch = 0 : i64, scratch_operands = 0 : i64, tpu.core_type = #tpu.core_type<tc>} {
    %c0 = arith.constant 0 : index
    %c0_0 = arith.constant 0 : index
    %0 = vector.load %arg0[%c0, %c0_0] : memref<16x32xf32, #tpu.memory_space<vmem>>, vector<16x32xf32>
    %c0_1 = arith.constant 0 : index
    %c0_2 = arith.constant 0 : index
    %1 = vector.load %arg2[%c0_1, %c0_2] : memref<16x1xf32, #tpu.memory_space<vmem>>, vector<16x1xf32>
    %2 = arith.truncf %0 : vector<16x32xf32> to vector<16x32xbf16>
    %c0_3 = arith.constant 0 : index
    %c0_4 = arith.constant 0 : index
    %3 = vector.load %arg3[%c0_3, %c0_4] : memref<32x48xbf16, #tpu.memory_space<vmem>>, vector<32x48xbf16>
    %cst = arith.constant dense<0.000000e+00> : vector<16x48xf32>
    %4 = tpu.matmul %2, %3, %cst {dimension_numbers = #tpu.dot_dimension_numbers<[1], [0], [0], [1], [0, 0, 1, 1], [], []>} : vector<16x32xbf16>, vector<32x48xbf16>, vector<16x48xf32> -> vector<16x48xf32>
    %c0_5 = arith.constant 0 : index
    %c0_6 = arith.constant 0 : index
    %5 = vector.load %arg4[%c0_5, %c0_6] : memref<1x48xf32, #tpu.memory_space<vmem>>, vector<1x48xf32>
    %6 = vector.broadcast %5 : vector<1x48xf32> to vector<16x48xf32>
    %7 = arith.addf %4, %6 : vector<16x48xf32>
    %8 = arith.truncf %7 : vector<16x48xf32> to vector<16x48xbf16>
    %9 = vector.extract_strided_slice %8 {offsets = [0, 0], sizes = [16, 8], strides = [1, 1]} : vector<16x48xbf16> to vector<16x8xbf16>
    %10 = vector.shape_cast %9 : vector<16x8xbf16> to vector<2x8x8xbf16>
    %11 = vector.extract_strided_slice %8 {offsets = [0, 8], sizes = [16, 8], strides = [1, 1]} : vector<16x48xbf16> to vector<16x8xbf16>
    %12 = vector.shape_cast %11 : vector<16x8xbf16> to vector<2x8x8xbf16>
    %13 = tpu.concatenate %10, %12 in 0 : vector<2x8x8xbf16>, vector<2x8x8xbf16> -> vector<4x8x8xbf16>
    %14 = vector.extract_strided_slice %8 {offsets = [0, 16], sizes = [16, 8], strides = [1, 1]} : vector<16x48xbf16> to vector<16x8xbf16>
    %15 = vector.shape_cast %14 : vector<16x8xbf16> to vector<2x8x8xbf16>
    %16 = vector.extract_strided_slice %8 {offsets = [0, 24], sizes = [16, 8], strides = [1, 1]} : vector<16x48xbf16> to vector<16x8xbf16>
    %17 = vector.shape_cast %16 : vector<16x8xbf16> to vector<2x8x8xbf16>
    %18 = tpu.concatenate %15, %17 in 0 : vector<2x8x8xbf16>, vector<2x8x8xbf16> -> vector<4x8x8xbf16>
    %19 = vector.extract_strided_slice %8 {offsets = [0, 32], sizes = [16, 8], strides = [1, 1]} : vector<16x48xbf16> to vector<16x8xbf16>
    %20 = vector.shape_cast %19 : vector<16x8xbf16> to vector<2x8x8xbf16>
    %21 = vector.extract_strided_slice %8 {offsets = [0, 40], sizes = [16, 8], strides = [1, 1]} : vector<16x48xbf16> to vector<16x8xbf16>
    %22 = vector.shape_cast %21 : vector<16x8xbf16> to vector<2x8x8xbf16>
    %23 = tpu.concatenate %20, %22 in 0 : vector<2x8x8xbf16>, vector<2x8x8xbf16> -> vector<4x8x8xbf16>
    "tpu.trace_start"() <{level = 10 : i32, message = "bqd,bkd->bqk"}> : () -> ()
    %cst_7 = arith.constant dense<0.000000e+00> : vector<4x8x8xf32>
    %24 = tpu.matmul %13, %18, %cst_7 {dimension_numbers = #tpu.dot_dimension_numbers<[2], [2], [1], [1], [0, 0, 0, 1, 1, 1], [0], [0]>} : vector<4x8x8xbf16>, vector<4x8x8xbf16>, vector<4x8x8xf32> -> vector<4x8x8xf32>
    "tpu.trace_stop"() : () -> ()
    %cst_8 = arith.constant 0.353553385 : f32
    %25 = vector.broadcast %cst_8 : f32 to vector<4x8x8xf32>
    %26 = arith.mulf %24, %25 : vector<4x8x8xf32>
    %c0_9 = arith.constant 0 : index
    %c0_10 = arith.constant 0 : index
    %c0_11 = arith.constant 0 : index
    %27 = vector.load %arg1[%c0_9, %c0_10, %c0_11] : memref<2x8x8xf32, #tpu.memory_space<vmem>>, vector<2x8x8xf32>
    %28 = tpu.concatenate %27, %27 in 0 : vector<2x8x8xf32>, vector<2x8x8xf32> -> vector<4x8x8xf32>
    %29 = arith.addf %26, %28 : vector<4x8x8xf32>
    %cst_12 = arith.constant dense<0xFF800000> : vector<4x8xf32>
    %30 = vector.multi_reduction <maximumf>, %29, %cst_12 [2] : vector<4x8x8xf32> to vector<4x8xf32>
    %31 = vector.shape_cast %30 : vector<4x8xf32> to vector<4x8x1xf32>
    %32 = vector.broadcast %31 : vector<4x8x1xf32> to vector<4x8x8xf32>
    %33 = arith.subf %29, %32 : vector<4x8x8xf32>
    %34 = math.exp %33 : vector<4x8x8xf32>
    %cst_13 = arith.constant dense<0.000000e+00> : vector<4x8xf32>
    %35 = vector.multi_reduction <add>, %34, %cst_13 [2] : vector<4x8x8xf32> to vector<4x8xf32>
    %36 = vector.shape_cast %35 : vector<4x8xf32> to vector<4x8x1xf32>
    %37 = tpu.reciprocal %36 {approx = true} : vector<4x8x1xf32> -> vector<4x8x1xf32>
    %38 = vector.broadcast %37 : vector<4x8x1xf32> to vector<4x8x8xf32>
    %39 = arith.mulf %34, %38 : vector<4x8x8xf32>
    %40 = arith.truncf %39 : vector<4x8x8xf32> to vector<4x8x8xbf16>
    %c0_14 = arith.constant 0 : index
    %c0_15 = arith.constant 0 : index
    %c0_16 = arith.constant 0 : index
    %41 = vector.load %arg16[%c0_14, %c0_15, %c0_16] : memref<4x8x8xbf16, #tpu.memory_space<vmem>>, vector<4x8x8xbf16>
    tpu.vector_store %arg16[%c0_14, %c0_15, %c0_16], %40 {strides = array<i32>} : memref<4x8x8xbf16, #tpu.memory_space<vmem>>, vector<4x8x8xbf16>,
    "tpu.trace_start"() <{level = 10 : i32, message = "bqk,bkd->bqd"}> : () -> ()
    %cst_17 = arith.constant dense<0.000000e+00> : vector<4x8x8xf32>
    %42 = tpu.matmul %40, %23, %cst_17 {dimension_numbers = #tpu.dot_dimension_numbers<[2], [1], [1], [2], [0, 0, 0, 1, 1, 2], [0], [0]>} : vector<4x8x8xbf16>, vector<4x8x8xbf16>, vector<4x8x8xf32> -> vector<4x8x8xf32>
    "tpu.trace_stop"() : () -> ()
    %c0_18 = arith.constant 0 : index
    %c0_19 = arith.constant 0 : index
    %43 = vector.load %arg6[%c0_18, %c0_19] : memref<1x32xf32, #tpu.memory_space<vmem>>, vector<1x32xf32>
    %44 = vector.extract_strided_slice %42 {offsets = [0, 0, 0], sizes = [2, 8, 8], strides = [1, 1, 1]} : vector<4x8x8xf32> to vector<2x8x8xf32>
    %45 = vector.shape_cast %44 : vector<2x8x8xf32> to vector<16x8xf32>
    %46 = arith.truncf %45 : vector<16x8xf32> to vector<16x8xbf16>
    %c0_20 = arith.constant 0 : index
    %c0_21 = arith.constant 0 : index
    %47 = vector.load %arg5[%c0_20, %c0_21] : memref<16x32xbf16, #tpu.memory_space<vmem>>, vector<8x32xbf16>
    %cst_22 = arith.constant dense<0.000000e+00> : vector<16x32xf32>
    %48 = tpu.matmul %46, %47, %cst_22 {dimension_numbers = #tpu.dot_dimension_numbers<[1], [0], [0], [1], [0, 0, 1, 1], [], []>} : vector<16x8xbf16>, vector<8x32xbf16>, vector<16x32xf32> -> vector<16x32xf32>
    %49 = vector.broadcast %43 : vector<1x32xf32> to vector<16x32xf32>
    %50 = arith.addf %49, %48 : vector<16x32xf32>
    %51 = vector.extract_strided_slice %42 {offsets = [2, 0, 0], sizes = [2, 8, 8], strides = [1, 1, 1]} : vector<4x8x8xf32> to vector<2x8x8xf32>
    %52 = vector.shape_cast %51 : vector<2x8x8xf32> to vector<16x8xf32>
    %53 = arith.truncf %52 : vector<16x8xf32> to vector<16x8xbf16>
    %c8 = arith.constant 8 : index
    %c0_23 = arith.constant 0 : index
    %54 = vector.load %arg5[%c8, %c0_23] : memref<16x32xbf16, #tpu.memory_space<vmem>>, vector<8x32xbf16>
    %cst_24 = arith.constant dense<0.000000e+00> : vector<16x32xf32>
    %55 = tpu.matmul %53, %54, %cst_24 {dimension_numbers = #tpu.dot_dimension_numbers<[1], [0], [0], [1], [0, 0, 1, 1], [], []>} : vector<16x8xbf16>, vector<8x32xbf16>, vector<16x32xf32> -> vector<16x32xf32>
    %56 = arith.addf %50, %55 : vector<16x32xf32>
    %57 = arith.addf %56, %0 : vector<16x32xf32>
    %c0_25 = arith.constant 0 : index
    %c0_26 = arith.constant 0 : index
    %58 = vector.load %arg7[%c0_25, %c0_26] : memref<1x32xf32, #tpu.memory_space<vmem>>, vector<1x32xf32>
    %c0_27 = arith.constant 0 : index
    %c0_28 = arith.constant 0 : index
    %59 = vector.load %arg8[%c0_27, %c0_28] : memref<1x32xf32, #tpu.memory_space<vmem>>, vector<1x32xf32>
    %cst_29 = arith.constant dense<0.000000e+00> : vector<16xf32>
    %60 = vector.multi_reduction <add>, %57, %cst_29 [1] : vector<16x32xf32> to vector<16xf32>
    %61 = vector.shape_cast %60 : vector<16xf32> to vector<16x1xf32>
    %cst_30 = arith.constant 3.125000e-02 : f32
    %62 = vector.broadcast %cst_30 : f32 to vector<16x1xf32>
    %63 = arith.mulf %61, %62 : vector<16x1xf32>
    %64 = vector.broadcast %63 : vector<16x1xf32> to vector<16x32xf32>
    %65 = arith.subf %57, %64 : vector<16x32xf32>
    %66 = arith.mulf %65, %65 : vector<16x32xf32>
    %cst_31 = arith.constant dense<0.000000e+00> : vector<16xf32>
    %67 = vector.multi_reduction <add>, %66, %cst_31 [1] : vector<16x32xf32> to vector<16xf32>
    %68 = vector.shape_cast %67 : vector<16xf32> to vector<16x1xf32>
    %cst_32 = arith.constant 3.125000e-02 : f32
    %69 = vector.broadcast %cst_32 : f32 to vector<16x1xf32>
    %70 = arith.mulf %68, %69 : vector<16x1xf32>
    %cst_33 = arith.constant 9.99999974E-6 : f32
    %71 = vector.broadcast %cst_33 : f32 to vector<16x1xf32>
    %72 = arith.addf %70, %71 : vector<16x1xf32>
    %73 = math.rsqrt %72 : vector<16x1xf32>
    %74 = vector.broadcast %73 : vector<16x1xf32> to vector<16x32xf32>
    %75 = arith.mulf %65, %74 : vector<16x32xf32>
    %76 = vector.broadcast %58 : vector<1x32xf32> to vector<16x32xf32>
    %77 = arith.mulf %75, %76 : vector<16x32xf32>
    %78 = vector.broadcast %59 : vector<1x32xf32> to vector<16x32xf32>
    %79 = arith.addf %77, %78 : vector<16x32xf32>
    %80 = vector.broadcast %1 : vector<16x1xf32> to vector<16x32xf32>
    %81 = arith.mulf %79, %80 : vector<16x32xf32>
    %82 = arith.truncf %81 : vector<16x32xf32> to vector<16x32xbf16>
    %c0_34 = arith.constant 0 : index
    %c0_35 = arith.constant 0 : index
    %83 = vector.load %arg9[%c0_34, %c0_35] : memref<32x64xbf16, #tpu.memory_space<vmem>>, vector<32x64xbf16>
    %cst_36 = arith.constant dense<0.000000e+00> : vector<16x64xf32>
    %84 = tpu.matmul %82, %83, %cst_36 {dimension_numbers = #tpu.dot_dimension_numbers<[1], [0], [0], [1], [0, 0, 1, 1], [], []>} : vector<16x32xbf16>, vector<32x64xbf16>, vector<16x64xf32> -> vector<16x64xf32>
    %c0_37 = arith.constant 0 : index
    %c0_38 = arith.constant 0 : index
    %85 = vector.load %arg10[%c0_37, %c0_38] : memref<1x64xf32, #tpu.memory_space<vmem>>, vector<1x64xf32>
    %86 = vector.broadcast %85 : vector<1x64xf32> to vector<16x64xf32>
    %87 = arith.addf %84, %86 : vector<16x64xf32>
    %cst_39 = arith.constant 0.000000e+00 : f32
    %88 = vector.broadcast %cst_39 : f32 to vector<16x64xf32>
    %89 = arith.maximumf %87, %88 : vector<16x64xf32>
    %90 = arith.truncf %89 : vector<16x64xf32> to vector<16x64xbf16>
    %c0_40 = arith.constant 0 : index
    %c0_41 = arith.constant 0 : index
    %91 = vector.load %arg11[%c0_40, %c0_41] : memref<64x32xbf16, #tpu.memory_space<vmem>>, vector<64x32xbf16>
    %cst_42 = arith.constant dense<0.000000e+00> : vector<16x32xf32>
    %92 = tpu.matmul %90, %91, %cst_42 {dimension_numbers = #tpu.dot_dimension_numbers<[1], [0], [0], [1], [0, 0, 1, 1], [], []>} : vector<16x64xbf16>, vector<64x32xbf16>, vector<16x32xf32> -> vector<16x32xf32>
    %c0_43 = arith.constant 0 : index
    %c0_44 = arith.constant 0 : index
    %93 = vector.load %arg12[%c0_43, %c0_44] : memref<1x32xf32, #tpu.memory_space<vmem>>, vector<1x32xf32>
    %94 = vector.broadcast %93 : vector<1x32xf32> to vector<16x32xf32>
    %95 = arith.addf %92, %94 : vector<16x32xf32>
    %96 = arith.addf %95, %81 : vector<16x32xf32>
    %c0_45 = arith.constant 0 : index
    %c0_46 = arith.constant 0 : index
    %97 = vector.load %arg13[%c0_45, %c0_46] : memref<1x32xf32, #tpu.memory_space<vmem>>, vector<1x32xf32>
    %c0_47 = arith.constant 0 : index
    %c0_48 = arith.constant 0 : index
    %98 = vector.load %arg14[%c0_47, %c0_48] : memref<1x32xf32, #tpu.memory_space<vmem>>, vector<1x32xf32>
    %cst_49 = arith.constant dense<0.000000e+00> : vector<16xf32>
    %99 = vector.multi_reduction <add>, %96, %cst_49 [1] : vector<16x32xf32> to vector<16xf32>
    %100 = vector.shape_cast %99 : vector<16xf32> to vector<16x1xf32>
    %cst_50 = arith.constant 3.125000e-02 : f32
    %101 = vector.broadcast %cst_50 : f32 to vector<16x1xf32>
    %102 = arith.mulf %100, %101 : vector<16x1xf32>
    %103 = vector.broadcast %102 : vector<16x1xf32> to vector<16x32xf32>
    %104 = arith.subf %96, %103 : vector<16x32xf32>
    %105 = arith.mulf %104, %104 : vector<16x32xf32>
    %cst_51 = arith.constant dense<0.000000e+00> : vector<16xf32>
    %106 = vector.multi_reduction <add>, %105, %cst_51 [1] : vector<16x32xf32> to vector<16xf32>
    %107 = vector.shape_cast %106 : vector<16xf32> to vector<16x1xf32>
    %cst_52 = arith.constant 3.125000e-02 : f32
    %108 = vector.broadcast %cst_52 : f32 to vector<16x1xf32>
    %109 = arith.mulf %107, %108 : vector<16x1xf32>
    %cst_53 = arith.constant 9.99999974E-6 : f32
    %110 = vector.broadcast %cst_53 : f32 to vector<16x1xf32>
    %111 = arith.addf %109, %110 : vector<16x1xf32>
    %112 = math.rsqrt %111 : vector<16x1xf32>
    %113 = vector.broadcast %112 : vector<16x1xf32> to vector<16x32xf32>
    %114 = arith.mulf %104, %113 : vector<16x32xf32>
    %115 = vector.broadcast %97 : vector<1x32xf32> to vector<16x32xf32>
    %116 = arith.mulf %114, %115 : vector<16x32xf32>
    %117 = vector.broadcast %98 : vector<1x32xf32> to vector<16x32xf32>
    %118 = arith.addf %116, %117 : vector<16x32xf32>
    %119 = vector.broadcast %1 : vector<16x1xf32> to vector<16x32xf32>
    %120 = arith.mulf %118, %119 : vector<16x32xf32>
    %c0_54 = arith.constant 0 : index
    %c0_55 = arith.constant 0 : index
    %121 = vector.load %arg15[%c0_54, %c0_55] : memref<16x32xf32, #tpu.memory_space<vmem>>, vector<16x32xf32>
    tpu.vector_store %arg15[%c0_54, %c0_55], %120 {strides = array<i32>} : memref<16x32xf32, #tpu.memory_space<vmem>>, vector<16x32xf32>,
    return
  }
}

</mosaic_0001>

<llo_original>
// kernel: encoder_layer.1
$region0: #{encoder_layer.1}
  #allocation0 [shape = 'u32[]', space=smem, size = 0x4, offset = 0x4, fixed_abs, tag = 'smem constant byte address 0x4 - core index']
  #allocation1 [shape = 'u32[144,128]{1,0:T(1,128)}', space=vmem, size = 0x12000, scoped, tag = 'internal scratch']
  %s0 = inlined_call_operand.vmem [shape: f32[16,32], index: 0, kind: input, shape index: {}]
  %s1 = inlined_call_operand.vmem [shape: f32[2,8,8], index: 1, kind: input, shape index: {}]
  %s2 = inlined_call_operand.vmem [shape: f32[16,1], index: 2, kind: input, shape index: {}]
  %s3 = inlined_call_operand.vmem [shape: bf16[32,48], index: 3, kind: input, shape index: {}]
  %s4 = inlined_call_operand.vmem [shape: f32[1,48], index: 4, kind: input, shape index: {}]
  %s5 = inlined_call_operand.vmem [shape: bf16[16,32], index: 5, kind: input, shape index: {}]
  %s6 = inlined_call_operand.vmem [shape: f32[1,32], index: 6, kind: input, shape index: {}]
  %s7 = inlined_call_operand.vmem [shape: f32[1,32], index: 7, kind: input, shape index: {}]
  %s8 = inlined_call_operand.vmem [shape: f32[1,32], index: 8, kind: input, shape index: {}]
  %s9 = inlined_call_operand.vmem [shape: bf16[32,64], index: 9, kind: input, shape index: {}]
  %s10 = inlined_call_operand.vmem [shape: f32[1,64], index: 10, kind: input, shape index: {}]
  %s11 = inlined_call_operand.vmem [shape: bf16[64,32], index: 11, kind: input, shape index: {}]
  %s12 = inlined_call_operand.vmem [shape: f32[1,32], index: 12, kind: input, shape index: {}]
  %s13 = inlined_call_operand.vmem [shape: f32[1,32], index: 13, kind: input, shape index: {}]
  %s14 = inlined_call_operand.vmem [shape: f32[1,32], index: 14, kind: input, shape index: {}]
  %s15 = inlined_call_operand.hbm [shape: f32[16,32], index: 15, kind: output, shape index: {0}]
  %s16 = inlined_call_operand.vmem [shape: bf16[4,8,8], index: 16, kind: output, shape index: {1}]
  %17 = xla_tuple %s15, %s16
  %s18 = sld [smem:[#allocation0]]
  $region78: #{encoder_layer.1} parent=0
    _
  %s20 = ssub.s32 1, %s18
  %s21 = scalar_select 0, %s20, %s18
  $region1: #{encoder_layer.1} parent=0
    #allocation2 [shape = 'u8[8192]{0}', space=vmem, size = 0x2000, scoped, tag = 'output window, operand 0, single buffered']
    #allocation3 [shape = 's32[1]{0}', space=sflag, size = 0x4, scoped, tag = 'scoped memory for encoder_layer.1']
    %22 = vsyncpa [#allocation3], 0
    // Predicated region
    $region2: #{encoder_layer.1} parent=1 // pred_check
      _
    $region3: #{encoder_layer.1} parent=1 // pred_check_branch
      %24 = sbr.rel (0) target = $region5
    $region4: #{encoder_layer.1} parent=1 // pred_region
      _
    $region5: #{encoder_layer.1} parent=1 // pred_fallthru
      _
    // Predicated region
    $region6: #{encoder_layer.1} parent=1 // pred_check
      _
    $region7: #{encoder_layer.1} parent=1 // pred_check_branch
      %26 = sbr.rel (0) target = $region9
    $region8: #{encoder_layer.1} parent=1 // pred_region
      _
    $region9: #{encoder_layer.1} parent=1 // pred_fallthru
      _
    // Predicated region
    $region10: #{encoder_layer.1} parent=1 // pred_check
      _
    $region11: #{encoder_layer.1} parent=1 // pred_check_branch
      %28 = sbr.rel (0) target = $region13
    $region12: #{encoder_layer.1} parent=1 // pred_region
      _
    $region13: #{encoder_layer.1} parent=1 // pred_fallthru
      _
    // Predicated region
    $region14: #{encoder_layer.1} parent=1 // pred_check
      _
    $region15: #{encoder_layer.1} parent=1 // pred_check_branch
      %30 = sbr.rel (0) target = $region17
    $region16: #{encoder_layer.1} parent=1 // pred_region
      _
    $region17: #{encoder_layer.1} parent=1 // pred_fallthru
      _
    // Predicated region
    $region18: #{encoder_layer.1} parent=1 // pred_check
      _
    $region19: #{encoder_layer.1} parent=1 // pred_check_branch
      %32 = sbr.rel (0) target = $region21
    $region20: #{encoder_layer.1} parent=1 // pred_region
      _
    $region21: #{encoder_layer.1} parent=1 // pred_fallthru
      _
    // Predicated region
    $region22: #{encoder_layer.1} parent=1 // pred_check
      _
    $region23: #{encoder_layer.1} parent=1 // pred_check_branch
      %34 = sbr.rel (0) target = $region25
    $region24: #{encoder_layer.1} parent=1 // pred_region
      _
    $region25: #{encoder_layer.1} parent=1 // pred_fallthru
      _
    // Predicated region
    $region26: #{encoder_layer.1} parent=1 // pred_check
      _
    $region27: #{encoder_layer.1} parent=1 // pred_check_branch
      %36 = sbr.rel (0) target = $region29
    $region28: #{encoder_layer.1} parent=1 // pred_region
      _
    $region29: #{encoder_layer.1} parent=1 // pred_fallthru
      _
    // Predicated region
    $region30: #{encoder_layer.1} parent=1 // pred_check
      _
    $region31: #{encoder_layer.1} parent=1 // pred_check_branch
      %38 = sbr.rel (0) target = $region33
    $region32: #{encoder_layer.1} parent=1 // pred_region
      _
    $region33: #{encoder_layer.1} parent=1 // pred_fallthru
      _
    // Predicated region
    $region34: #{encoder_layer.1} parent=1 // pred_check
      _
    $region35: #{encoder_layer.1} parent=1 // pred_check_branch
      %40 = sbr.rel (0) target = $region37
    $region36: #{encoder_layer.1} parent=1 // pred_region
      _
    $region37: #{encoder_layer.1} parent=1 // pred_fallthru
      _
    // Predicated region
    $region38: #{encoder_layer.1} parent=1 // pred_check
      _
    $region39: #{encoder_layer.1} parent=1 // pred_check_branch
      %42 = sbr.rel (0) target = $region41
    $region40: #{encoder_layer.1} parent=1 // pred_region
      _
    $region41: #{encoder_layer.1} parent=1 // pred_fallthru
      _
    // Predicated region
    $region42: #{encoder_layer.1} parent=1 // pred_check
      _
    $region43: #{encoder_layer.1} parent=1 // pred_check_branch
      %44 = sbr.rel (0) target = $region45
    $region44: #{encoder_layer.1} parent=1 // pred_region
      _
    $region45: #{encoder_layer.1} parent=1 // pred_fallthru
      _
    // Predicated region
    $region46: #{encoder_layer.1} parent=1 // pred_check
      _
    $region47: #{encoder_layer.1} parent=1 // pred_check_branch
      %46 = sbr.rel (0) target = $region49
    $region48: #{encoder_layer.1} parent=1 // pred_region
      _
    $region49: #{encoder_layer.1} parent=1 // pred_fallthru
      _
    // Predicated region
    $region50: #{encoder_layer.1} parent=1 // pred_check
      _
    $region51: #{encoder_layer.1} parent=1 // pred_check_branch
      %48 = sbr.rel (0) target = $region53
    $region52: #{encoder_layer.1} parent=1 // pred_region
      _
    $region53: #{encoder_layer.1} parent=1 // pred_fallthru
      _
    // Predicated region
    $region54: #{encoder_layer.1} parent=1 // pred_check
      _
    $region55: #{encoder_layer.1} parent=1 // pred_check_branch
      %50 = sbr.rel (0) target = $region57
    $region56: #{encoder_layer.1} parent=1 // pred_region
      _
    $region57: #{encoder_layer.1} parent=1 // pred_fallthru
      _
    // Predicated region
    $region58: #{encoder_layer.1} parent=1 // pred_check
      _
    $region59: #{encoder_layer.1} parent=1 // pred_check_branch
      %52 = sbr.rel (0) target = $region61
    $region60: #{encoder_layer.1} parent=1 // pred_region
      _
    $region61: #{encoder_layer.1} parent=1 // pred_fallthru
      _
    %v54 = vld [vmem:[%s0] sm:$0xff]
    %v55 = vld [vmem:[%s0 + $0x8] sm:$0xff]
    %v56 = vld [vmem:[%s2] sm:$0xff]
    %v57 = vld [vmem:[%s2 + $0x8] sm:$0xff]
    %v58 = vpack.c.bf16 %v55, %v54
    %v59 = vld [vmem:[%s3] sm:$0xf]
    %v60 = vld [vmem:[%s3 + $0x4] sm:$0xf]
    %v61 = vld [vmem:[%s3 + $0x8] sm:$0xf]
    %v62 = vld [vmem:[%s3 + $0xc] sm:$0xf]
    %v63 = vld [vmem:[%s4] sm:$0x1]
    %v65 = vlaneseq
    %v66 = vshrl.u32 %v65, 7
    %v67 = vsub.s32 0, %v66
    %v68 = vrot.slane %v63, %v67
    %v74 = vunpack.c.l.b16 %v59
    %v75 = vunpack.c.l.b16 %v60
    %v76 = vunpack.c.l.b16 %v61
    %v77 = vunpack.c.l.b16 %v62
    %v78 = vpack.c.b16 %v75, %v74
    %v79 = vpack.c.b16 %v77, %v76
    %vm82 = vcmask 261120
    %v84 = vsel %vm82, %v58, 0
    %86 = vmatprep.subr.bf16.mxu0 0
    %87 = vmatpush1.bf16.msra.mxu0 %v78
    %88 = vmatprep.subr.bf16.mxu0 0
    %89 = vmatpush1.bf16.msra.mxu0 %v79
    %90 = vmatprep.subr.bf16.mxu0 0
    %91 = vmatpush1.bf16.msra.mxu0 0
    %92 = vmatprep.subr.bf16.mxu0 0
    %93 = vmatpush1.bf16.msra.mxu0 0
    %94 = vmatprep.subr.bf16.mxu0 0
    %95 = vmatpush1.bf16.msra.mxu0 0
    %96 = vmatprep.subr.bf16.mxu0 0
    %97 = vmatpush1.bf16.msra.mxu0 0
    %98 = vmatprep.subr.bf16.mxu0 0
    %99 = vmatpush1.bf16.msra.mxu0 0
    %100 = vmatprep.subr.bf16.mxu0 0
    %101 = vmatpush1.bf16.msra.mxu0 0
    %102 = vmatprep.subr.bf16.mxu0 0
    %103 = vmatpush1.bf16.msra.mxu0 0
    %104 = vmatprep.subr.bf16.mxu0 0
    %105 = vmatpush1.bf16.msra.mxu0 0
    %106 = vmatprep.subr.bf16.mxu0 0
    %107 = vmatpush1.bf16.msra.mxu0 0
    %108 = vmatprep.subr.bf16.mxu0 0
    %109 = vmatpush1.bf16.msra.mxu0 0
    %110 = vmatprep.subr.bf16.mxu0 0
    %111 = vmatpush1.bf16.msra.mxu0 0
    %112 = vmatprep.subr.bf16.mxu0 0
    %113 = vmatpush1.bf16.msra.mxu0 0
    %114 = vmatprep.subr.bf16.mxu0 0
    %115 = vmatpush1.bf16.msra.mxu0 0
    %116 = vmatprep.subr.bf16.mxu0 0
    %117 = vmatpush1.bf16.msra.mxu0 0
    %118 = vmatprep.mubr.bf16.mxu0 0
    %119 = vmatmul.mubr.bf16.gmra.mrb[0].mxu0 %v84
    %v120 = vpop.f32.mrb[0].mxu0
    %v121 = vadd.f32 %v68, %v120
    %v122 = vpop.f32.mrb[0].mxu0
    %v123 = vpop.f32.mrb[0].mxu0
    %v124 = vadd.f32 %v68, %v123
    %v125 = vpop.f32.mrb[0].mxu0
    %126 = vdwg.mxu0
    %v127 = vpack.c.bf16 %v124, %v121
    %v129 = vunpack.c.l.b16 %v127
    %v130 = vunpack.c.h.b16 %v127
    %v131 = vpack.c.b16 %v129, %v129
    %v132 = vpack.c.b16 %v130, %v130
    %133 = vrot.lane.b32.xlu0 %v131, 120
    %v134 = vpop.permute.xlu0 %133
    %135 = vrot.lane.b32.xlu0 %v132, 120
    %v136 = vpop.permute.xlu0 %135
    %137 = vrot.lane.b32.xlu0 %v131, 112
    %v138 = vpop.permute.xlu0 %137
    %vm139 = vcmask 64512
    %v141 = vsel %vm139, %v131, 0
    %v144 = vsel %vm139, %v138, 0
    %146 = vmatprep.subr.bf16.mxu0 0
    %147 = vmatpush1.bf16.xpose.msra.mxu0 %v144
    %148 = vmatprep.subr.bf16.mxu0 0
    %149 = vmatpush1.bf16.xpose.msra.mxu0 0
    %150 = vmatprep.subr.bf16.mxu0 0
    %151 = vmatpush1.bf16.xpose.msra.mxu0 0
    %152 = vmatprep.subr.bf16.mxu0 0
    %153 = vmatpush1.bf16.xpose.msra.mxu0 0
    %154 = vmatprep.subr.bf16.mxu0 0
    %155 = vmatpush1.bf16.xpose.msra.mxu0 0
    %156 = vmatprep.subr.bf16.mxu0 0
    %157 = vmatpush1.bf16.xpose.msra.mxu0 0
    %158 = vmatprep.subr.bf16.mxu0 0
    %159 = vmatpush1.bf16.xpose.msra.mxu0 0
    %160 = vmatprep.subr.bf16.mxu0 0
    %161 = vmatpush1.bf16.xpose.msra.mxu0 0
    %162 = vmatprep.subr.bf16.mxu0 0
    %163 = vmatpush1.bf16.xpose.msra.mxu0 0
    %164 = vmatprep.subr.bf16.mxu0 0
    %165 = vmatpush1.bf16.xpose.msra.mxu0 0
    %166 = vmatprep.subr.bf16.mxu0 0
    %167 = vmatpush1.bf16.xpose.msra.mxu0 0
    %168 = vmatprep.subr.bf16.mxu0 0
    %169 = vmatpush1.bf16.xpose.msra.mxu0 0
    %170 = vmatprep.subr.bf16.mxu0 0
    %171 = vmatpush1.bf16.xpose.msra.mxu0 0
    %172 = vmatprep.subr.bf16.mxu0 0
    %173 = vmatpush1.bf16.xpose.msra.mxu0 0
    %174 = vmatprep.subr.bf16.mxu0 0
    %175 = vmatpush1.bf16.xpose.msra.mxu0 0
    %176 = vmatprep.subr.bf16.mxu0 0
    %177 = vmatpush1.bf16.xpose.msra.mxu0 0
    %178 = vmatprep.mubr.bf16.mxu0 0
    %179 = vmatmul.mubr.bf16.gmra.mrb[0].mxu0 %v141
    %v180 = vpop.f32.mrb[0].mxu0
    %v181 = vadd.f32 0.0, %v180
    %v182 = vpop.f32.mrb[0].mxu0
    %v183 = vpop.f32.mrb[0].mxu0
    %v184 = vpop.f32.mrb[0].mxu0
    %185 = vdwg.mxu0
    %186 = vrot.lane.b32.xlu0 %v132, 112
    %v187 = vpop.permute.xlu0 %186
    %v189 = vsel %vm139, %v132, 0
    %v192 = vsel %vm139, %v187, 0
    %194 = vmatprep.subr.bf16.mxu0 0
    %195 = vmatpush1.bf16.xpose.msra.mxu0 %v192
    %196 = vmatprep.subr.bf16.mxu0 0
    %197 = vmatpush1.bf16.xpose.msra.mxu0 0
    %198 = vmatprep.subr.bf16.mxu0 0
    %199 = vmatpush1.bf16.xpose.msra.mxu0 0
    %200 = vmatprep.subr.bf16.mxu0 0
    %201 = vmatpush1.bf16.xpose.msra.mxu0 0
    %202 = vmatprep.subr.bf16.mxu0 0
    %203 = vmatpush1.bf16.xpose.msra.mxu0 0
    %204 = vmatprep.subr.bf16.mxu0 0
    %205 = vmatpush1.bf16.xpose.msra.mxu0 0
    %206 = vmatprep.subr.bf16.mxu0 0
    %207 = vmatpush1.bf16.xpose.msra.mxu0 0
    %208 = vmatprep.subr.bf16.mxu0 0
    %209 = vmatpush1.bf16.xpose.msra.mxu0 0
    %210 = vmatprep.subr.bf16.mxu0 0
    %211 = vmatpush1.bf16.xpose.msra.mxu0 0
    %212 = vmatprep.subr.bf16.mxu0 0
    %213 = vmatpush1.bf16.xpose.msra.mxu0 0
    %214 = vmatprep.subr.bf16.mxu0 0
    %215 = vmatpush1.bf16.xpose.msra.mxu0 0
    %216 = vmatprep.subr.bf16.mxu0 0
    %217 = vmatpush1.bf16.xpose.msra.mxu0 0
    %218 = vmatprep.subr.bf16.mxu0 0
    %219 = vmatpush1.bf16.xpose.msra.mxu0 0
    %220 = vmatprep.subr.bf16.mxu0 0
    %221 = vmatpush1.bf16.xpose.msra.mxu0 0
    %222 = vmatprep.subr.bf16.mxu0 0
    %223 = vmatpush1.bf16.xpose.msra.mxu0 0
    %224 = vmatprep.subr.bf16.mxu0 0
    %225 = vmatpush1.bf16.xpose.msra.mxu0 0
    %226 = vmatprep.mubr.bf16.mxu0 0
    %227 = vmatmul.mubr.bf16.gmra.mrb[0].mxu0 %v189
    %v228 = vpop.f32.mrb[0].mxu0
    %v229 = vadd.f32 0.0, %v228
    %v230 = vpop.f32.mrb[0].mxu0
    %v231 = vpop.f32.mrb[0].mxu0
    %v232 = vpop.f32.mrb[0].mxu0
    %233 = vdwg.mxu0
    %v234 = vunpack.c.l.b16 %v134
    %v235 = vpack.c.b16 %v234, %v234
    %236 = vrot.lane.b32.xlu0 %v235, 112
    %v237 = vpop.permute.xlu0 %236
    %v239 = vsel %vm139, %v134, 0
    %v242 = vsel %vm139, %v237, 0
    %244 = vmatprep.subr.bf16.mxu0 0
    %245 = vmatpush1.bf16.xpose.msra.mxu0 %v242
    %246 = vmatprep.subr.bf16.mxu0 0
    %247 = vmatpush1.bf16.xpose.msra.mxu0 0
    %248 = vmatprep.subr.bf16.mxu0 0
    %249 = vmatpush1.bf16.xpose.msra.mxu0 0
    %250 = vmatprep.subr.bf16.mxu0 0
    %251 = vmatpush1.bf16.xpose.msra.mxu0 0
    %252 = vmatprep.subr.bf16.mxu0 0
    %253 = vmatpush1.bf16.xpose.msra.mxu0 0
    %254 = vmatprep.subr.bf16.mxu0 0
    %255 = vmatpush1.bf16.xpose.msra.mxu0 0
    %256 = vmatprep.subr.bf16.mxu0 0
    %257 = vmatpush1.bf16.xpose.msra.mxu0 0
    %258 = vmatprep.subr.bf16.mxu0 0
    %259 = vmatpush1.bf16.xpose.msra.mxu0 0
    %260 = vmatprep.subr.bf16.mxu0 0
    %261 = vmatpush1.bf16.xpose.msra.mxu0 0
    %262 = vmatprep.subr.bf16.mxu0 0
    %263 = vmatpush1.bf16.xpose.msra.mxu0 0
    %264 = vmatprep.subr.bf16.mxu0 0
    %265 = vmatpush1.bf16.xpose.msra.mxu0 0
    %266 = vmatprep.subr.bf16.mxu0 0
    %267 = vmatpush1.bf16.xpose.msra.mxu0 0
    %268 = vmatprep.subr.bf16.mxu0 0
    %269 = vmatpush1.bf16.xpose.msra.mxu0 0
    %270 = vmatprep.subr.bf16.mxu0 0
    %271 = vmatpush1.bf16.xpose.msra.mxu0 0
    %272 = vmatprep.subr.bf16.mxu0 0
    %273 = vmatpush1.bf16.xpose.msra.mxu0 0
    %274 = vmatprep.subr.bf16.mxu0 0
    %275 = vmatpush1.bf16.xpose.msra.mxu0 0
    %276 = vmatprep.mubr.bf16.mxu0 0
    %277 = vmatmul.mubr.bf16.gmra.mrb[0].mxu0 %v239
    %v278 = vpop.f32.mrb[0].mxu0
    %v279 = vadd.f32 0.0, %v278
    %v280 = vpop.f32.mrb[0].mxu0
    %v281 = vpop.f32.mrb[0].mxu0
    %v282 = vpop.f32.mrb[0].mxu0
    %283 = vdwg.mxu0
    %v284 = vunpack.c.l.b16 %v136
    %v285 = vpack.c.b16 %v284, %v284
    %286 = vrot.lane.b32.xlu0 %v285, 112
    %v287 = vpop.permute.xlu0 %286
    %v289 = vsel %vm139, %v136, 0
    %v292 = vsel %vm139, %v287, 0
    %294 = vmatprep.subr.bf16.mxu0 0
    %295 = vmatpush1.bf16.xpose.msra.mxu0 %v292
    %296 = vmatprep.subr.bf16.mxu0 0
    %297 = vmatpush1.bf16.xpose.msra.mxu0 0
    %298 = vmatprep.subr.bf16.mxu0 0
    %299 = vmatpush1.bf16.xpose.msra.mxu0 0
    %300 = vmatprep.subr.bf16.mxu0 0
    %301 = vmatpush1.bf16.xpose.msra.mxu0 0
    %302 = vmatprep.subr.bf16.mxu0 0
    %303 = vmatpush1.bf16.xpose.msra.mxu0 0
    %304 = vmatprep.subr.bf16.mxu0 0
    %305 = vmatpush1.bf16.xpose.msra.mxu0 0
    %306 = vmatprep.subr.bf16.mxu0 0
    %307 = vmatpush1.bf16.xpose.msra.mxu0 0
    %308 = vmatprep.subr.bf16.mxu0 0
    %309 = vmatpush1.bf16.xpose.msra.mxu0 0
    %310 = vmatprep.subr.bf16.mxu0 0
    %311 = vmatpush1.bf16.xpose.msra.mxu0 0
    %312 = vmatprep.subr.bf16.mxu0 0
    %313 = vmatpush1.bf16.xpose.msra.mxu0 0
    %314 = vmatprep.subr.bf16.mxu0 0
    %315 = vmatpush1.bf16.xpose.msra.mxu0 0
    %316 = vmatprep.subr.bf16.mxu0 0
    %317 = vmatpush1.bf16.xpose.msra.mxu0 0
    %318 = vmatprep.subr.bf16.mxu0 0
    %319 = vmatpush1.bf16.xpose.msra.mxu0 0
    %320 = vmatprep.subr.bf16.mxu0 0
    %321 = vmatpush1.bf16.xpose.msra.mxu0 0
    %322 = vmatprep.subr.bf16.mxu0 0
    %323 = vmatpush1.bf16.xpose.msra.mxu0 0
    %324 = vmatprep.subr.bf16.mxu0 0
    %325 = vmatpush1.bf16.xpose.msra.mxu0 0
    %326 = vmatprep.mubr.bf16.mxu0 0
    %327 = vmatmul.mubr.bf16.gmra.mrb[0].mxu0 %v289
    %v328 = vpop.f32.mrb[0].mxu0
    %v329 = vadd.f32 0.0, %v328
    %v330 = vpop.f32.mrb[0].mxu0
    %v331 = vpop.f32.mrb[0].mxu0
    %v332 = vpop.f32.mrb[0].mxu0
    %333 = vdwg.mxu0
    %v334 = vmul.f32 %v181, 0.35355338
    %v335 = vmul.f32 %v229, 0.35355338
    %v336 = vmul.f32 %v279, 0.35355338
    %v337 = vmul.f32 %v329, 0.35355338
    %v338 = vld [vmem:[%s1] sm:$0xff]
    %v339 = vld [vmem:[%s1 + $0x8] sm:$0xff]
    %v340 = vadd.f32 %v334, %v338
    %v341 = vadd.f32 %v335, %v339
    %v342 = vadd.f32 %v336, %v338
    %v343 = vadd.f32 %v337, %v339
    %v344 = vsel %vm139, %v340, -inf
    %345 = vmax.xlane.f32.xlu0 %v344
    %v346 = vpop.xlane.xlu0 %345
    %v347 = vsel %vm139, %v341, -inf
    %348 = vmax.xlane.f32.xlu0 %v347
    %v349 = vpop.xlane.xlu0 %348
    %v350 = vsel %vm139, %v342, -inf
    %351 = vmax.xlane.f32.xlu0 %v350
    %v352 = vpop.xlane.xlu0 %351
    %v353 = vsel %vm139, %v343, -inf
    %354 = vmax.xlane.f32.xlu0 %v353
    %v355 = vpop.xlane.xlu0 %354
    %v356 = vsub.f32 %v340, %v346
    %v357 = vsub.f32 %v341, %v349
    %v358 = vsub.f32 %v342, %v352
    %v359 = vsub.f32 %v343, %v355
    %v360 = vmul.f32 %v356, 1.442695
    %v361 = vpow.pop %v360
    %v362 = vmul.f32 %v357, 1.442695
    %v363 = vpow.pop %v362
    %v364 = vmul.f32 %v358, 1.442695
    %v365 = vpow.pop %v364
    %v366 = vmul.f32 %v359, 1.442695
    %v367 = vpow.pop %v366
    %v368 = vsel %vm139, %v361, 0.0
    %369 = vadd.xlane.f32.xlu0 %v368
    %v370 = vpop.xlane.xlu0 %369
    %v371 = vsel %vm139, %v363, 0.0
    %372 = vadd.xlane.f32.xlu0 %v371
    %v373 = vpop.xlane.xlu0 %372
    %v374 = vsel %vm139, %v365, 0.0
    %375 = vadd.xlane.f32.xlu0 %v374
    %v376 = vpop.xlane.xlu0 %375
    %v377 = vsel %vm139, %v367, 0.0
    %378 = vadd.xlane.f32.xlu0 %v377
    %v379 = vpop.xlane.xlu0 %378
    %v380 = vrcp.pop %v370
    %v381 = vrcp.pop %v373
    %v382 = vrcp.pop %v376
    %v383 = vrcp.pop %v379
    %v384 = vmul.f32 %v361, %v380
    %v385 = vmul.f32 %v363, %v381
    %v386 = vmul.f32 %v365, %v382
    %v387 = vmul.f32 %v367, %v383
    %v388 = vpack.c.bf16 %v384, %v384
    %v389 = vpack.c.bf16 %v385, %v385
    %v390 = vpack.c.bf16 %v386, %v386
    %v391 = vpack.c.bf16 %v387, %v387
    %vm392 = vcmask 60416
    %393 = vst.msk [vmem:[%s16] sm:$0xf] %vm392, %v388
    %394 = vst.msk [vmem:[%s16 + $0x4] sm:$0xf] %vm392, %v389
    %395 = vst.msk [vmem:[%s16 + $0x8] sm:$0xf] %vm392, %v390
    %396 = vst.msk [vmem:[%s16 + $0xc] sm:$0xf] %vm392, %v391
    %397 = vrot.lane.b32.xlu0 %v131, 96
    %v398 = vpop.permute.xlu0 %397
    %v400 = vsel %vm139, %v388, 0
    %vm402 = vcmask 1043456
    %v404 = vsel %vm402, %v398, 0
    %406 = vmatprep.subr.bf16.mxu0 0
    %407 = vmatpush1.bf16.msra.mxu0 %v404
    %408 = vmatprep.subr.bf16.mxu0 0
    %409 = vmatpush1.bf16.msra.mxu0 0
    %410 = vmatprep.subr.bf16.mxu0 0
    %411 = vmatpush1.bf16.msra.mxu0 0
    %412 = vmatprep.subr.bf16.mxu0 0
    %413 = vmatpush1.bf16.msra.mxu0 0
    %414 = vmatprep.subr.bf16.mxu0 0
    %415 = vmatpush1.bf16.msra.mxu0 0
    %416 = vmatprep.subr.bf16.mxu0 0
    %417 = vmatpush1.bf16.msra.mxu0 0
    %418 = vmatprep.subr.bf16.mxu0 0
    %419 = vmatpush1.bf16.msra.mxu0 0
    %420 = vmatprep.subr.bf16.mxu0 0
    %421 = vmatpush1.bf16.msra.mxu0 0
    %422 = vmatprep.subr.bf16.mxu0 0
    %423 = vmatpush1.bf16.msra.mxu0 0
    %424 = vmatprep.subr.bf16.mxu0 0
    %425 = vmatpush1.bf16.msra.mxu0 0
    %426 = vmatprep.subr.bf16.mxu0 0
    %427 = vmatpush1.bf16.msra.mxu0 0
    %428 = vmatprep.subr.bf16.mxu0 0
    %429 = vmatpush1.bf16.msra.mxu0 0
    %430 = vmatprep.subr.bf16.mxu0 0
    %431 = vmatpush1.bf16.msra.mxu0 0
    %432 = vmatprep.subr.bf16.mxu0 0
    %433 = vmatpush1.bf16.msra.mxu0 0
    %434 = vmatprep.subr.bf16.mxu0 0
    %435 = vmatpush1.bf16.msra.mxu0 0
    %436 = vmatprep.subr.bf16.mxu0 0
    %437 = vmatpush1.bf16.msra.mxu0 0
    %438 = vmatprep.mubr.bf16.mxu0 0
    %439 = vmatmul.mubr.bf16.gmra.mrb[0].mxu0 %v400
    %v440 = vpop.f32.mrb[0].mxu0
    %v441 = vadd.f32 0.0, %v440
    %v442 = vpop.f32.mrb[0].mxu0
    %v443 = vpop.f32.mrb[0].mxu0
    %v444 = vpop.f32.mrb[0].mxu0
    %445 = vdwg.mxu0
    %446 = vrot.lane.b32.xlu0 %v132, 96
    %v447 = vpop.permute.xlu0 %446
    %v449 = vsel %vm139, %v389, 0
    %v452 = vsel %vm402, %v447, 0
    %454 = vmatprep.subr.bf16.mxu0 0
    %455 = vmatpush1.bf16.msra.mxu0 %v452
    %456 = vmatprep.subr.bf16.mxu0 0
    %457 = vmatpush1.bf16.msra.mxu0 0
    %458 = vmatprep.subr.bf16.mxu0 0
    %459 = vmatpush1.bf16.msra.mxu0 0
    %460 = vmatprep.subr.bf16.mxu0 0
    %461 = vmatpush1.bf16.msra.mxu0 0
    %462 = vmatprep.subr.bf16.mxu0 0
    %463 = vmatpush1.bf16.msra.mxu0 0
    %464 = vmatprep.subr.bf16.mxu0 0
    %465 = vmatpush1.bf16.msra.mxu0 0
    %466 = vmatprep.subr.bf16.mxu0 0
    %467 = vmatpush1.bf16.msra.mxu0 0
    %468 = vmatprep.subr.bf16.mxu0 0
    %469 = vmatpush1.bf16.msra.mxu0 0
    %470 = vmatprep.subr.bf16.mxu0 0
    %471 = vmatpush1.bf16.msra.mxu0 0
    %472 = vmatprep.subr.bf16.mxu0 0
    %473 = vmatpush1.bf16.msra.mxu0 0
    %474 = vmatprep.subr.bf16.mxu0 0
    %475 = vmatpush1.bf16.msra.mxu0 0
    %476 = vmatprep.subr.bf16.mxu0 0
    %477 = vmatpush1.bf16.msra.mxu0 0
    %478 = vmatprep.subr.bf16.mxu0 0
    %479 = vmatpush1.bf16.msra.mxu0 0
    %480 = vmatprep.subr.bf16.mxu0 0
    %481 = vmatpush1.bf16.msra.mxu0 0
    %482 = vmatprep.subr.bf16.mxu0 0
    %483 = vmatpush1.bf16.msra.mxu0 0
    %484 = vmatprep.subr.bf16.mxu0 0
    %485 = vmatpush1.bf16.msra.mxu0 0
    %486 = vmatprep.mubr.bf16.mxu0 0
    %487 = vmatmul.mubr.bf16.gmra.mrb[0].mxu0 %v449
    %v488 = vpop.f32.mrb[0].mxu0
    %v489 = vadd.f32 0.0, %v488
    %v490 = vpop.f32.mrb[0].mxu0
    %v491 = vpop.f32.mrb[0].mxu0
    %v492 = vpop.f32.mrb[0].mxu0
    %493 = vdwg.mxu0
    %494 = vrot.lane.b32.xlu0 %v235, 96
    %v495 = vpop.permute.xlu0 %494
    %v497 = vsel %vm139, %v390, 0
    %v500 = vsel %vm402, %v495, 0
    %502 = vmatprep.subr.bf16.mxu0 0
    %503 = vmatpush1.bf16.msra.mxu0 %v500
    %504 = vmatprep.subr.bf16.mxu0 0
    %505 = vmatpush1.bf16.msra.mxu0 0
    %506 = vmatprep.subr.bf16.mxu0 0
    %507 = vmatpush1.bf16.msra.mxu0 0
    %508 = vmatprep.subr.bf16.mxu0 0
    %509 = vmatpush1.bf16.msra.mxu0 0
    %510 = vmatprep.subr.bf16.mxu0 0
    %511 = vmatpush1.bf16.msra.mxu0 0
    %512 = vmatprep.subr.bf16.mxu0 0
    %513 = vmatpush1.bf16.msra.mxu0 0
    %514 = vmatprep.subr.bf16.mxu0 0
    %515 = vmatpush1.bf16.msra.mxu0 0
    %516 = vmatprep.subr.bf16.mxu0 0
    %517 = vmatpush1.bf16.msra.mxu0 0
    %518 = vmatprep.subr.bf16.mxu0 0
    %519 = vmatpush1.bf16.msra.mxu0 0
    %520 = vmatprep.subr.bf16.mxu0 0
    %521 = vmatpush1.bf16.msra.mxu0 0
    %522 = vmatprep.subr.bf16.mxu0 0
    %523 = vmatpush1.bf16.msra.mxu0 0
    %524 = vmatprep.subr.bf16.mxu0 0
    %525 = vmatpush1.bf16.msra.mxu0 0
    %526 = vmatprep.subr.bf16.mxu0 0
    %527 = vmatpush1.bf16.msra.mxu0 0
    %528 = vmatprep.subr.bf16.mxu0 0
    %529 = vmatpush1.bf16.msra.mxu0 0
    %530 = vmatprep.subr.bf16.mxu0 0
    %531 = vmatpush1.bf16.msra.mxu0 0
    %532 = vmatprep.subr.bf16.mxu0 0
    %533 = vmatpush1.bf16.msra.mxu0 0
    %534 = vmatprep.mubr.bf16.mxu0 0
    %535 = vmatmul.mubr.bf16.gmra.mrb[0].mxu0 %v497
    %v536 = vpop.f32.mrb[0].mxu0
    %v537 = vadd.f32 0.0, %v536
    %v538 = vpop.f32.mrb[0].mxu0
    %v539 = vpop.f32.mrb[0].mxu0
    %v540 = vpop.f32.mrb[0].mxu0
    %541 = vdwg.mxu0
    %542 = vrot.lane.b32.xlu0 %v285, 96
    %v543 = vpop.permute.xlu0 %542
    %v545 = vsel %vm139, %v391, 0
    %v548 = vsel %vm402, %v543, 0
    %550 = vmatprep.subr.bf16.mxu0 0
    %551 = vmatpush1.bf16.msra.mxu0 %v548
    %552 = vmatprep.subr.bf16.mxu0 0
    %553 = vmatpush1.bf16.msra.mxu0 0
    %554 = vmatprep.subr.bf16.mxu0 0
    %555 = vmatpush1.bf16.msra.mxu0 0
    %556 = vmatprep.subr.bf16.mxu0 0
    %557 = vmatpush1.bf16.msra.mxu0 0
    %558 = vmatprep.subr.bf16.mxu0 0
    %559 = vmatpush1.bf16.msra.mxu0 0
    %560 = vmatprep.subr.bf16.mxu0 0
    %561 = vmatpush1.bf16.msra.mxu0 0
    %562 = vmatprep.subr.bf16.mxu0 0
    %563 = vmatpush1.bf16.msra.mxu0 0
    %564 = vmatprep.subr.bf16.mxu0 0
    %565 = vmatpush1.bf16.msra.mxu0 0
    %566 = vmatprep.subr.bf16.mxu0 0
    %567 = vmatpush1.bf16.msra.mxu0 0
    %568 = vmatprep.subr.bf16.mxu0 0
    %569 = vmatpush1.bf16.msra.mxu0 0
    %570 = vmatprep.subr.bf16.mxu0 0
    %571 = vmatpush1.bf16.msra.mxu0 0
    %572 = vmatprep.subr.bf16.mxu0 0
    %573 = vmatpush1.bf16.msra.mxu0 0
    %574 = vmatprep.subr.bf16.mxu0 0
    %575 = vmatpush1.bf16.msra.mxu0 0
    %576 = vmatprep.subr.bf16.mxu0 0
    %577 = vmatpush1.bf16.msra.mxu0 0
    %578 = vmatprep.subr.bf16.mxu0 0
    %579 = vmatpush1.bf16.msra.mxu0 0
    %580 = vmatprep.subr.bf16.mxu0 0
    %581 = vmatpush1.bf16.msra.mxu0 0
    %582 = vmatprep.mubr.bf16.mxu0 0
    %583 = vmatmul.mubr.bf16.gmra.mrb[0].mxu0 %v545
    %v584 = vpop.f32.mrb[0].mxu0
    %v585 = vadd.f32 0.0, %v584
    %v586 = vpop.f32.mrb[0].mxu0
    %v587 = vpop.f32.mrb[0].mxu0
    %v588 = vpop.f32.mrb[0].mxu0
    %589 = vdwg.mxu0
    %v590 = vld [vmem:[%s6] sm:$0x1]
    %v591 = vpack.c.bf16 %v489, %v441
    %v592 = vld [vmem:[%s5] sm:$0xf]
    %v594 = vsel %vm139, %v591, 0
    %v597 = vsel %vm402, %v592, 0
    %599 = vmatprep.subr.bf16.mxu0 0
    %600 = vmatpush1.bf16.msra.mxu0 %v597
    %601 = vmatprep.subr.bf16.mxu0 0
    %602 = vmatpush1.bf16.msra.mxu0 0
    %603 = vmatprep.subr.bf16.mxu0 0
    %604 = vmatpush1.bf16.msra.mxu0 0
    %605 = vmatprep.subr.bf16.mxu0 0
    %606 = vmatpush1.bf16.msra.mxu0 0
    %607 = vmatprep.subr.bf16.mxu0 0
    %608 = vmatpush1.bf16.msra.mxu0 0
    %609 = vmatprep.subr.bf16.mxu0 0
    %610 = vmatpush1.bf16.msra.mxu0 0
    %611 = vmatprep.subr.bf16.mxu0 0
    %612 = vmatpush1.bf16.msra.mxu0 0
    %613 = vmatprep.subr.bf16.mxu0 0
    %614 = vmatpush1.bf16.msra.mxu0 0
    %615 = vmatprep.subr.bf16.mxu0 0
    %616 = vmatpush1.bf16.msra.mxu0 0
    %617 = vmatprep.subr.bf16.mxu0 0
    %618 = vmatpush1.bf16.msra.mxu0 0
    %619 = vmatprep.subr.bf16.mxu0 0
    %620 = vmatpush1.bf16.msra.mxu0 0
    %621 = vmatprep.subr.bf16.mxu0 0
    %622 = vmatpush1.bf16.msra.mxu0 0
    %623 = vmatprep.subr.bf16.mxu0 0
    %624 = vmatpush1.bf16.msra.mxu0 0
    %625 = vmatprep.subr.bf16.mxu0 0
    %626 = vmatpush1.bf16.msra.mxu0 0
    %627 = vmatprep.subr.bf16.mxu0 0
    %628 = vmatpush1.bf16.msra.mxu0 0
    %629 = vmatprep.subr.bf16.mxu0 0
    %630 = vmatpush1.bf16.msra.mxu0 0
    %631 = vmatprep.mubr.bf16.mxu0 0
    %632 = vmatmul.mubr.bf16.gmra.mrb[0].mxu0 %v594
    %v633 = vpop.f32.mrb[0].mxu0
    %v634 = vadd.f32 0.0, %v633
    %v635 = vpop.f32.mrb[0].mxu0
    %v636 = vpop.f32.mrb[0].mxu0
    %v637 = vadd.f32 0.0, %v636
    %v638 = vpop.f32.mrb[0].mxu0
    %639 = vdwg.mxu0
    %v641 = vlaneseq
    %v642 = vshrl.u32 %v641, 7
    %v643 = vsub.s32 0, %v642
    %v644 = vrot.slane %v590, %v643
    %v646 = vadd.f32 %v644, %v634
    %v647 = vadd.f32 %v644, %v637
    %v648 = vpack.c.bf16 %v585, %v537
    %v649 = vld [vmem:[%s5 + $0x4] sm:$0xf]
    %v651 = vsel %vm139, %v648, 0
    %v654 = vsel %vm402, %v649, 0
    %656 = vmatprep.subr.bf16.mxu0 0
    %657 = vmatpush1.bf16.msra.mxu0 %v654
    %658 = vmatprep.subr.bf16.mxu0 0
    %659 = vmatpush1.bf16.msra.mxu0 0
    %660 = vmatprep.subr.bf16.mxu0 0
    %661 = vmatpush1.bf16.msra.mxu0 0
    %662 = vmatprep.subr.bf16.mxu0 0
    %663 = vmatpush1.bf16.msra.mxu0 0
    %664 = vmatprep.subr.bf16.mxu0 0
    %665 = vmatpush1.bf16.msra.mxu0 0
    %666 = vmatprep.subr.bf16.mxu0 0
    %667 = vmatpush1.bf16.msra.mxu0 0
    %668 = vmatprep.subr.bf16.mxu0 0
    %669 = vmatpush1.bf16.msra.mxu0 0
    %670 = vmatprep.subr.bf16.mxu0 0
    %671 = vmatpush1.bf16.msra.mxu0 0
    %672 = vmatprep.subr.bf16.mxu0 0
    %673 = vmatpush1.bf16.msra.mxu0 0
    %674 = vmatprep.subr.bf16.mxu0 0
    %675 = vmatpush1.bf16.msra.mxu0 0
    %676 = vmatprep.subr.bf16.mxu0 0
    %677 = vmatpush1.bf16.msra.mxu0 0
    %678 = vmatprep.subr.bf16.mxu0 0
    %679 = vmatpush1.bf16.msra.mxu0 0
    %680 = vmatprep.subr.bf16.mxu0 0
    %681 = vmatpush1.bf16.msra.mxu0 0
    %682 = vmatprep.subr.bf16.mxu0 0
    %683 = vmatpush1.bf16.msra.mxu0 0
    %684 = vmatprep.subr.bf16.mxu0 0
    %685 = vmatpush1.bf16.msra.mxu0 0
    %686 = vmatprep.subr.bf16.mxu0 0
    %687 = vmatpush1.bf16.msra.mxu0 0
    %688 = vmatprep.mubr.bf16.mxu0 0
    %689 = vmatmul.mubr.bf16.gmra.mrb[0].mxu0 %v651
    %v690 = vpop.f32.mrb[0].mxu0
    %v691 = vadd.f32 0.0, %v690
    %v692 = vpop.f32.mrb[0].mxu0
    %v693 = vpop.f32.mrb[0].mxu0
    %v694 = vadd.f32 0.0, %v693
    %v695 = vpop.f32.mrb[0].mxu0
    %696 = vdwg.mxu0
    %v697 = vadd.f32 %v646, %v691
    %v698 = vadd.f32 %v647, %v694
    %v699 = vadd.f32 %v697, %v54
    %v700 = vadd.f32 %v698, %v55
    %v701 = vld [vmem:[%s7] sm:$0x1]
    %v702 = vld [vmem:[%s8] sm:$0x1]
    %v703 = vsel %vm82, %v699, 0.0
    %704 = vadd.xlane.f32.xlu0 %v703
    %v705 = vpop.xlane.xlu0 %704
    %v706 = vsel %vm82, %v700, 0.0
    %707 = vadd.xlane.f32.xlu0 %v706
    %v708 = vpop.xlane.xlu0 %707
    %v709 = vmul.f32 %v705, 0.03125
    %v710 = vmul.f32 %v708, 0.03125
    %v711 = vsub.f32 %v699, %v709
    %v712 = vsub.f32 %v700, %v710
    %v713 = vmul.f32 %v711, %v711
    %v714 = vmul.f32 %v712, %v712
    %v715 = vsel %vm82, %v713, 0.0
    %716 = vadd.xlane.f32.xlu0 %v715
    %v717 = vpop.xlane.xlu0 %716
    %v718 = vsel %vm82, %v714, 0.0
    %719 = vadd.xlane.f32.xlu0 %v718
    %v720 = vpop.xlane.xlu0 %719
    %v721 = vmul.f32 %v717, 0.03125
    %v722 = vmul.f32 %v720, 0.03125
    %v723 = vadd.f32 %v721, 1e-05
    %v724 = vadd.f32 %v722, 1e-05
    %v725 = vrsqrt.pop %v723
    %v726 = vrsqrt.pop %v724
    %v727 = vmul.f32 %v711, %v725
    %v728 = vmul.f32 %v712, %v726
    %v730 = vlaneseq
    %v731 = vshrl.u32 %v730, 7
    %v732 = vsub.s32 0, %v731
    %v733 = vrot.slane %v701, %v732
    %v735 = vmul.f32 %v727, %v733
    %v736 = vmul.f32 %v728, %v733
    %v738 = vlaneseq
    %v739 = vshrl.u32 %v738, 7
    %v740 = vsub.s32 0, %v739
    %v741 = vrot.slane %v702, %v740
    %v743 = vadd.f32 %v735, %v741
    %v744 = vadd.f32 %v736, %v741
    %746 = vset.pattern.permute.xlu0 0
    %747 = vperm.xlu0 %746, %v56
    %v748 = vpop.permute.xlu0 %747
    %751 = vset.pattern.permute.xlu0 0
    %752 = vperm.xlu0 %751, %v57
    %v753 = vpop.permute.xlu0 %752
    %v755 = vmul.f32 %v743, %v748
    %v756 = vmul.f32 %v744, %v753
    %v757 = vpack.c.bf16 %v756, %v755
    %v758 = vld [vmem:[%s9] sm:$0xf]
    %v759 = vld [vmem:[%s9 + $0x4] sm:$0xf]
    %v760 = vld [vmem:[%s9 + $0x8] sm:$0xf]
    %v761 = vld [vmem:[%s9 + $0xc] sm:$0xf]
    %v762 = vld [vmem:[%s10] sm:$0x1]
    %v764 = vlaneseq
    %v765 = vshrl.u32 %v764, 7
    %v766 = vsub.s32 0, %v765
    %v767 = vrot.slane %v762, %v766
    %v773 = vunpack.c.l.b16 %v758
    %v774 = vunpack.c.l.b16 %v759
    %v775 = vunpack.c.l.b16 %v760
    %v776 = vunpack.c.l.b16 %v761
    %v777 = vpack.c.b16 %v774, %v773
    %v778 = vpack.c.b16 %v776, %v775
    %v782 = vsel %vm82, %v757, 0
    %784 = vmatprep.subr.bf16.mxu0 0
    %785 = vmatpush1.bf16.msra.mxu0 %v777
    %786 = vmatprep.subr.bf16.mxu0 0
    %787 = vmatpush1.bf16.msra.mxu0 %v778
    %788 = vmatprep.subr.bf16.mxu0 0
    %789 = vmatpush1.bf16.msra.mxu0 0
    %790 = vmatprep.subr.bf16.mxu0 0
    %791 = vmatpush1.bf16.msra.mxu0 0
    %792 = vmatprep.subr.bf16.mxu0 0
    %793 = vmatpush1.bf16.msra.mxu0 0
    %794 = vmatprep.subr.bf16.mxu0 0
    %795 = vmatpush1.bf16.msra.mxu0 0
    %796 = vmatprep.subr.bf16.mxu0 0
    %797 = vmatpush1.bf16.msra.mxu0 0
    %798 = vmatprep.subr.bf16.mxu0 0
    %799 = vmatpush1.bf16.msra.mxu0 0
    %800 = vmatprep.subr.bf16.mxu0 0
    %801 = vmatpush1.bf16.msra.mxu0 0
    %802 = vmatprep.subr.bf16.mxu0 0
    %803 = vmatpush1.bf16.msra.mxu0 0
    %804 = vmatprep.subr.bf16.mxu0 0
    %805 = vmatpush1.bf16.msra.mxu0 0
    %806 = vmatprep.subr.bf16.mxu0 0
    %807 = vmatpush1.bf16.msra.mxu0 0
    %808 = vmatprep.subr.bf16.mxu0 0
    %809 = vmatpush1.bf16.msra.mxu0 0
    %810 = vmatprep.subr.bf16.mxu0 0
    %811 = vmatpush1.bf16.msra.mxu0 0
    %812 = vmatprep.subr.bf16.mxu0 0
    %813 = vmatpush1.bf16.msra.mxu0 0
    %814 = vmatprep.subr.bf16.mxu0 0
    %815 = vmatpush1.bf16.msra.mxu0 0
    %816 = vmatprep.mubr.bf16.mxu0 0
    %817 = vmatmul.mubr.bf16.gmra.mrb[0].mxu0 %v782
    %v818 = vpop.f32.mrb[0].mxu0
    %v819 = vadd.f32 %v767, %v818
    %v820 = vpop.f32.mrb[0].mxu0
    %v821 = vpop.f32.mrb[0].mxu0
    %v822 = vadd.f32 %v767, %v821
    %v823 = vpop.f32.mrb[0].mxu0
    %824 = vdwg.mxu0
    %v825 = vmax.f32 %v819, 0.0
    %v826 = vmax.f32 %v822, 0.0
    %v827 = vpack.c.bf16 %v826, %v825
    %v828 = vld [vmem:[%s11] sm:$0xf]
    %v829 = vld [vmem:[%s11 + $0x4] sm:$0xf]
    %v830 = vld [vmem:[%s11 + $0x8] sm:$0xf]
    %v831 = vld [vmem:[%s11 + $0xc] sm:$0xf]
    %v832 = vld [vmem:[%s11 + $0x10] sm:$0xf]
    %v833 = vld [vmem:[%s11 + $0x14] sm:$0xf]
    %v834 = vld [vmem:[%s11 + $0x18] sm:$0xf]
    %v835 = vld [vmem:[%s11 + $0x1c] sm:$0xf]
    %v836 = vld [vmem:[%s12] sm:$0x1]
    %v838 = vlaneseq
    %v839 = vshrl.u32 %v838, 7
    %v840 = vsub.s32 0, %v839
    %v841 = vrot.slane %v836, %v840
    %v851 = vunpack.c.l.b16 %v828
    %v852 = vunpack.c.l.b16 %v829
    %v853 = vunpack.c.l.b16 %v830
    %v854 = vunpack.c.l.b16 %v831
    %v855 = vunpack.c.l.b16 %v832
    %v856 = vunpack.c.l.b16 %v833
    %v857 = vunpack.c.l.b16 %v834
    %v858 = vunpack.c.l.b16 %v835
    %v859 = vpack.c.b16 %v852, %v851
    %v860 = vpack.c.b16 %v854, %v853
    %v861 = vpack.c.b16 %v856, %v855
    %v862 = vpack.c.b16 %v858, %v857
    %vm867 = vcmask 523264
    %v869 = vsel %vm867, %v827, 0
    %871 = vmatprep.subr.bf16.mxu0 0
    %872 = vmatpush1.bf16.msra.mxu0 %v859
    %873 = vmatprep.subr.bf16.mxu0 0
    %874 = vmatpush1.bf16.msra.mxu0 %v860
    %875 = vmatprep.subr.bf16.mxu0 0
    %876 = vmatpush1.bf16.msra.mxu0 %v861
    %877 = vmatprep.subr.bf16.mxu0 0
    %878 = vmatpush1.bf16.msra.mxu0 %v862
    %879 = vmatprep.subr.bf16.mxu0 0
    %880 = vmatpush1.bf16.msra.mxu0 0
    %881 = vmatprep.subr.bf16.mxu0 0
    %882 = vmatpush1.bf16.msra.mxu0 0
    %883 = vmatprep.subr.bf16.mxu0 0
    %884 = vmatpush1.bf16.msra.mxu0 0
    %885 = vmatprep.subr.bf16.mxu0 0
    %886 = vmatpush1.bf16.msra.mxu0 0
    %887 = vmatprep.subr.bf16.mxu0 0
    %888 = vmatpush1.bf16.msra.mxu0 0
    %889 = vmatprep.subr.bf16.mxu0 0
    %890 = vmatpush1.bf16.msra.mxu0 0
    %891 = vmatprep.subr.bf16.mxu0 0
    %892 = vmatpush1.bf16.msra.mxu0 0
    %893 = vmatprep.subr.bf16.mxu0 0
    %894 = vmatpush1.bf16.msra.mxu0 0
    %895 = vmatprep.subr.bf16.mxu0 0
    %896 = vmatpush1.bf16.msra.mxu0 0
    %897 = vmatprep.subr.bf16.mxu0 0
    %898 = vmatpush1.bf16.msra.mxu0 0
    %899 = vmatprep.subr.bf16.mxu0 0
    %900 = vmatpush1.bf16.msra.mxu0 0
    %901 = vmatprep.subr.bf16.mxu0 0
    %902 = vmatpush1.bf16.msra.mxu0 0
    %903 = vmatprep.mubr.bf16.mxu0 0
    %904 = vmatmul.mubr.bf16.gmra.mrb[0].mxu0 %v869
    %v905 = vpop.f32.mrb[0].mxu0
    %v906 = vadd.f32 %v841, %v905
    %v907 = vpop.f32.mrb[0].mxu0
    %v908 = vpop.f32.mrb[0].mxu0
    %v909 = vadd.f32 %v841, %v908
    %v910 = vpop.f32.mrb[0].mxu0
    %911 = vdwg.mxu0
    %v912 = vadd.f32 %v906, %v755
    %v913 = vadd.f32 %v909, %v756
    %v914 = vld [vmem:[%s13] sm:$0x1]
    %v915 = vld [vmem:[%s14] sm:$0x1]
    %v916 = vsel %vm82, %v912, 0.0
    %917 = vadd.xlane.f32.xlu0 %v916
    %v918 = vpop.xlane.xlu0 %917
    %v919 = vsel %vm82, %v913, 0.0
    %920 = vadd.xlane.f32.xlu0 %v919
    %v921 = vpop.xlane.xlu0 %920
    %v922 = vmul.f32 %v918, 0.03125
    %v923 = vmul.f32 %v921, 0.03125
    %v924 = vsub.f32 %v912, %v922
    %v925 = vsub.f32 %v913, %v923
    %v926 = vmul.f32 %v924, %v924
    %v927 = vmul.f32 %v925, %v925
    %v928 = vsel %vm82, %v926, 0.0
    %929 = vadd.xlane.f32.xlu0 %v928
    %v930 = vpop.xlane.xlu0 %929
    %v931 = vsel %vm82, %v927, 0.0
    %932 = vadd.xlane.f32.xlu0 %v931
    %v933 = vpop.xlane.xlu0 %932
    %v934 = vmul.f32 %v930, 0.03125
    %v935 = vmul.f32 %v933, 0.03125
    %v936 = vadd.f32 %v934, 1e-05
    %v937 = vadd.f32 %v935, 1e-05
    %v938 = vrsqrt.pop %v936
    %v939 = vrsqrt.pop %v937
    %v940 = vmul.f32 %v924, %v938
    %v941 = vmul.f32 %v925, %v939
    %v943 = vlaneseq
    %v944 = vshrl.u32 %v943, 7
    %v945 = vsub.s32 0, %v944
    %v946 = vrot.slane %v914, %v945
    %v948 = vmul.f32 %v940, %v946
    %v949 = vmul.f32 %v941, %v946
    %v951 = vlaneseq
    %v952 = vshrl.u32 %v951, 7
    %v953 = vsub.s32 0, %v952
    %v954 = vrot.slane %v915, %v953
    %v956 = vadd.f32 %v948, %v954
    %v957 = vadd.f32 %v949, %v954
    %v958 = vmul.f32 %v956, %v748
    %v959 = vmul.f32 %v957, %v753
    %960 = vst.msk [vmem:[#allocation2] sm:$0xff] %vm82, %v958
    %961 = vst.msk [vmem:[#allocation2 + $0x8] sm:$0xff] %vm82, %v959
    // Predicated region
    $region62: #{encoder_layer.1} parent=1 // pred_check
      _
    $region63: #{encoder_layer.1} parent=1 // pred_check_branch
      %963 = sbr.rel (0) target = $region65
    $region64: #{encoder_layer.1} parent=1 // pred_region
      %s965 = ssub.s32 256, 256
      %966 = vsyncadd [#allocation3], %s965
      %s967 = sshll.u32 [#allocation2], 4
      %s968 = int_to_ptr.vmem [resolvable:$true] %s967
      %973 = dma.vmem_to_hbm [thread:$0]  %s968, 256, %s15, [#allocation3], 128, 128, 8
    $region65: #{encoder_layer.1} parent=1 // pred_fallthru
      _
    // Predicated region
    $region66: #{encoder_layer.1} parent=1 // pred_check
      _
    $region67: #{encoder_layer.1} parent=1 // pred_check_branch
      %975 = sbr.rel (0) target = $region69
    $region68: #{encoder_layer.1} parent=1 // pred_region
      _
    $region69: #{encoder_layer.1} parent=1 // pred_fallthru
      _
    // Predicated region
    $region70: #{encoder_layer.1} parent=1 // pred_check
      _
    $region71: #{encoder_layer.1} parent=1 // pred_check_branch
      %977 = sbr.rel (0) target = $region73
    $region72: #{encoder_layer.1} parent=1 // pred_region
      %978 = dma.done [#allocation3], 256
    $region73: #{encoder_layer.1} parent=1 // pred_fallthru
      _
    // Predicated region
    $region74: #{encoder_layer.1} parent=1 // pred_check
      _
    $region75: #{encoder_layer.1} parent=1 // pred_check_branch
      %980 = sbr.rel (0) target = $region77
    $region76: #{encoder_layer.1} parent=1 // pred_region
      _
    $region77: #{encoder_layer.1} parent=1 // pred_fallthru
      _
    %981 = vsyncpa [#allocation3], 1

</llo_original>
